<compile_context>
chip_gen: v5e
topology: v5e:2x2
jax: 0.10.0
libtpu: 0.0.40
codegen_flags: <defaults>
</compile_context>

<pallas_src>
import math
from functools import partial

import jax
import jax.numpy as jnp
from jax.experimental import pallas as pl
from jax.experimental.pallas import tpu as pltpu

K_PAD = 128  # padded contraction dim (60 -> 128): unmasked loads, full MXU tile
N_PAD = 128  # padded output feature dim (10 -> 128): lane-dense unmasked stores


def fused_mlp_kernel(x_ref, w_ref, b_ref, o_ref):
    # Single fused affine op: x @ (W1 @ W2) + (b1 @ W2 + b2).
    # bf16 operands on the MXU, f32 accumulate, f32 bias add on the VPU.
    acc = jnp.dot(x_ref[...], w_ref[...], preferred_element_type=jnp.float32)
    o_ref[...] = (acc + b_ref[...]).astype(o_ref.dtype)


def _round_up(n, m):
    return ((n + m - 1) // m) * m


def fuse_and_pad_params(w1, b1, w2, b2, compute_dtype=jnp.bfloat16):
    """Fold the two Linear layers into one affine map; pad to lane-dense tiles.

    Weights are stored (in_features, out_features), i.e. PyTorch weight.T.
    Done once outside the kernel (one-time cost).
    """
    hi = jax.lax.Precision.HIGHEST
    w12 = jnp.dot(w1, w2, precision=hi)          # (60, 10)  f32
    b12 = jnp.dot(b1, w2, precision=hi) + b2     # (1, 10)   f32
    d_in, d_out = w12.shape
    w12_p = jnp.zeros((K_PAD, N_PAD), jnp.float32).at[:d_in, :d_out].set(w12)
    b12_p = jnp.zeros((1, N_PAD), jnp.float32).at[:, :d_out].set(b12)
    # Weights in bf16 for the MXU fast path; bias kept f32 for the VPU add.
    return w12_p.astype(compute_dtype), b12_p


@partial(jax.jit, static_argnames=("d_out", "tile_b"))
def net_forward(x, w12_p, b12_p, d_out=10, tile_b=512):
    B, d_in = x.shape
    assert d_in <= K_PAD and d_out <= N_PAD

    # Batch tiling: big tiles amortize per-step overhead; shrink for tiny B.
    tile_b = min(tile_b, _round_up(B, 8))
    b_pad = _round_up(B, tile_b)

    # Zero-pad batch + contraction dims; cast activations to the MXU dtype.
    x_p = jnp.zeros((b_pad, K_PAD), jnp.float32).at[:B, :d_in].set(x)
    x_p = x_p.astype(w12_p.dtype)

    grid = (b_pad // tile_b,)
    flops = 2 * b_pad * K_PAD * N_PAD
    bytes_accessed = (x_p.size * x_p.dtype.itemsize
                      + w12_p.size * w12_p.dtype.itemsize
                      + b12_p.size * b12_p.dtype.itemsize
                      + b_pad * N_PAD * 4)

    out_p = pl.pallas_call(
        fused_mlp_kernel,
        out_shape=jax.ShapeDtypeStruct((b_pad, N_PAD), jnp.float32),
        grid=grid,
        in_specs=[
            # x: blocked along batch, pipelined across grid steps.
            pl.BlockSpec((tile_b, K_PAD), lambda i: (i, 0)),
            # Fused weights: constant index map -> DMA'd once, VMEM-resident.
            pl.BlockSpec((K_PAD, N_PAD), lambda i: (0, 0)),
            # Fused bias (f32): constant index map, VMEM-resident.
            pl.BlockSpec((1, N_PAD), lambda i: (0, 0)),
        ],
        out_specs=pl.BlockSpec((tile_b, N_PAD), lambda i: (i, 0)),
        compiler_params=pltpu.CompilerParams(
            dimension_semantics=("parallel",)),
        cost_estimate=pl.CostEstimate(
            flops=flops, transcendentals=0, bytes_accessed=bytes_accessed),
    )(x_p, w12_p, b12_p)

    return out_p[:B, :d_out]


def init_linear_params(key, in_features, out_features):
    """Deterministic init mimicking torch.nn.Linear default (uniform +/- 1/sqrt(fan_in))."""
    kw, kb = jax.random.split(key)
    bound = 1.0 / math.sqrt(in_features)
    # Stored as (in_features, out_features) -- i.e. PyTorch weight transposed.
    w = jax.random.uniform(kw, (in_features, out_features), jnp.float32,
                           minval=-bound, maxval=bound)
    b = jax.random.uniform(kb, (1, out_features), jnp.float32,
                           minval=-bound, maxval=bound)
    return w, b


if __name__ == "__main__":
    key = jax.random.PRNGKey(0)
    kx, k1, k2 = jax.random.split(key, 3)

    B = 8
    x = jax.random.normal(kx, (B, 60), jnp.float32)

    w1, b1 = init_linear_params(k1, 60, 100)
    w2, b2 = init_linear_params(k2, 100, 10)

    # One-time fusion + padding of the parameters, then the kernel call.
    w12_p, b12_p = fuse_and_pad_params(w1, b1, w2, b2)
    out = net_forward(x, w12_p, b12_p, d_out=10)
    jax.block_until_ready(out)

    # Reference check against the unfused two-layer f32 computation.
    ref = (x @ w1 + b1) @ w2 + b2
    assert out.shape == (B, 10)
    assert jnp.allclose(out, ref, atol=5e-2, rtol=5e-2), (
        "max abs err = %f" % float(jnp.max(jnp.abs(out - ref))))

    print("KERNEL_OK")
</pallas_src>

<mosaic_0001>
module attributes {stable_mosaic.version = 11 : i64} {
  func.func @fused_mlp_kernel(%arg0: i32, %arg1: memref<8x128xbf16, #tpu.memory_space<vmem>>, %arg2: memref<128x128xbf16, #tpu.memory_space<vmem>>, %arg3: memref<1x128xf32, #tpu.memory_space<vmem>>, %arg4: memref<8x128xf32, #tpu.memory_space<vmem>>) attributes {dimension_semantics = [#tpu.dimension_semantics<parallel>], iteration_bounds = array<i64: 1>, scalar_prefetch = 0 : i64, scratch_operands = 0 : i64, tpu.core_type = #tpu.core_type<tc>, window_params = [{transform_indices = @transform_0, window_bounds = array<i64: 8, 128>}, {pipeline_mode = #tpu.pipeline_mode<synchronous>, transform_indices = @transform_1, window_bounds = array<i64: 128, 128>}, {pipeline_mode = #tpu.pipeline_mode<synchronous>, transform_indices = @transform_2, window_bounds = array<i64: 1, 128>}, {transform_indices = @transform_3, window_bounds = array<i64: 8, 128>}]} {
    %c0 = arith.constant 0 : index
    %c0_0 = arith.constant 0 : index
    %0 = vector.load %arg1[%c0, %c0_0] : memref<8x128xbf16, #tpu.memory_space<vmem>>, vector<8x128xbf16>
    %c0_1 = arith.constant 0 : index
    %c0_2 = arith.constant 0 : index
    %1 = vector.load %arg2[%c0_1, %c0_2] : memref<128x128xbf16, #tpu.memory_space<vmem>>, vector<128x128xbf16>
    %cst = arith.constant dense<0.000000e+00> : vector<8x128xf32>
    %2 = tpu.matmul %0, %1, %cst {dimension_numbers = #tpu.dot_dimension_numbers<[1], [0], [0], [1], [0, 0, 1, 1], [], []>} : vector<8x128xbf16>, vector<128x128xbf16>, vector<8x128xf32> -> vector<8x128xf32>
    %c0_3 = arith.constant 0 : index
    %c0_4 = arith.constant 0 : index
    %3 = vector.load %arg3[%c0_3, %c0_4] : memref<1x128xf32, #tpu.memory_space<vmem>>, vector<1x128xf32>
    %4 = vector.broadcast %3 : vector<1x128xf32> to vector<8x128xf32>
    %5 = arith.addf %2, %4 : vector<8x128xf32>
    %c0_5 = arith.constant 0 : index
    %c0_6 = arith.constant 0 : index
    %6 = vector.load %arg4[%c0_5, %c0_6] : memref<8x128xf32, #tpu.memory_space<vmem>>, vector<8x128xf32>
    tpu.vector_store %arg4[%c0_5, %c0_6], %5 {strides = array<i32>} : memref<8x128xf32, #tpu.memory_space<vmem>>, vector<8x128xf32>,
    return
  }
  func.func @transform_0(%arg0: i32) -> (i32, i32) {
    %c0_i32 = arith.constant 0 : i32
    %c0_i32_0 = arith.constant 0 : i32
    return %arg0, %c0_i32 : i32, i32
  }
  func.func @transform_1(%arg0: i32) -> (i32, i32) {
    %c0_i32 = arith.constant 0 : i32
    %c0_i32_0 = arith.constant 0 : i32
    %c0_i32_1 = arith.constant 0 : i32
    return %c0_i32, %c0_i32_0 : i32, i32
  }
  func.func @transform_2(%arg0: i32) -> (i32, i32) {
    %c0_i32 = arith.constant 0 : i32
    %c0_i32_0 = arith.constant 0 : i32
    %c0_i32_1 = arith.constant 0 : i32
    return %c0_i32, %c0_i32_0 : i32, i32
  }
  func.func @transform_3(%arg0: i32) -> (i32, i32) {
    %c0_i32 = arith.constant 0 : i32
    %c0_i32_0 = arith.constant 0 : i32
    return %arg0, %c0_i32 : i32, i32
  }
}

</mosaic_0001>

<llo_original>
// kernel: net_forward.1
$region0: #{net_forward.1}
  #allocation0 [shape = 'u32[]', space=smem, size = 0x4, offset = 0x4, fixed_abs, tag = 'smem constant byte address 0x4 - core index']
  #allocation1 [shape = 'u32[72,128]{1,0:T(1,128)}', space=vmem, size = 0x9000, scoped, tag = 'internal scratch']
  %s0 = inlined_call_operand.vmem [shape: bf16[8,128], index: 0, kind: input, shape index: {}]
  %s1 = inlined_call_operand.hbm [shape: bf16[128,128], index: 1, kind: input, shape index: {}]
  %s2 = inlined_call_operand.vmem [shape: f32[1,128], index: 2, kind: input, shape index: {}]
  %s3 = inlined_call_operand.hbm [shape: f32[8,128], index: 3, kind: output, shape index: {}]
  %s4 = sld [smem:[#allocation0]]
  $region26: #{net_forward.1} parent=0
    _
  %s6 = ssub.s32 1, %s4
  %s7 = scalar_select 0, %s6, %s4
  $region1: #{net_forward.1} parent=0
    #allocation2 [shape = 'u8[32768]{0}', space=vmem, size = 0x8000, scoped, tag = 'input window, operand 1, single buffered']
    #allocation3 [shape = 's32[1]{0}', space=sflag, size = 0x4, scoped, tag = 'scoped memory for net_forward.1']
    #allocation4 [shape = 's32[1]{0}', space=sflag, size = 0x4, scoped, tag = 'scoped memory for net_forward.1']
    #allocation5 [shape = 'u8[4096]{0}', space=vmem, size = 0x1000, scoped, tag = 'output window, operand 0, single buffered']
    %8 = vsyncpa [#allocation3], 0
    %9 = vsyncpa [#allocation4], 0
    // Predicated region
    $region2: #{net_forward.1} parent=1 // pred_check
      _
    $region3: #{net_forward.1} parent=1 // pred_check_branch
      %11 = sbr.rel (0) target = $region5
    $region4: #{net_forward.1} parent=1 // pred_region
      _
    $region5: #{net_forward.1} parent=1 // pred_fallthru
      _
    // Predicated region
    $region6: #{net_forward.1} parent=1 // pred_check
      _
    $region7: #{net_forward.1} parent=1 // pred_check_branch
      %13 = sbr.rel (0) target = $region9
    $region8: #{net_forward.1} parent=1 // pred_region
      %15 = vsyncadd [#allocation3], 0
      %s16 = sshll.u32 %s1, 4
      %s17 = int_to_ptr.hbm [resolvable:$true] %s16
      %s18 = sshll.u32 [#allocation2], 4
      %s19 = int_to_ptr.vmem [resolvable:$true] %s18
      %24 = dma.hbm_to_vmem [thread:$0]  %s17, 1024, %s19, [#allocation3], 64, 64, 4
    $region9: #{net_forward.1} parent=1 // pred_fallthru
      _
    // Predicated region
    $region10: #{net_forward.1} parent=1 // pred_check
      _
    $region11: #{net_forward.1} parent=1 // pred_check_branch
      %26 = sbr.rel (0) target = $region13
    $region12: #{net_forward.1} parent=1 // pred_region
      _
    $region13: #{net_forward.1} parent=1 // pred_fallthru
      _
    // Predicated region
    $region14: #{net_forward.1} parent=1 // pred_check
      _
    $region15: #{net_forward.1} parent=1 // pred_check_branch
      %28 = sbr.rel (0) target = $region17
    $region16: #{net_forward.1} parent=1 // pred_region
      %30 = dma.done [#allocation3], 1024
    $region17: #{net_forward.1} parent=1 // pred_fallthru
      _
    %v31 = vld [vmem:[%s0] sm:$0xf]
    %v32 = vld [vmem:[#allocation2] sm:$0xf]
    %v33 = vld [vmem:[#allocation2 + $0x4] sm:$0xf]
    %v34 = vld [vmem:[#allocation2 + $0x8] sm:$0xf]
    %v35 = vld [vmem:[#allocation2 + $0xc] sm:$0xf]
    %v36 = vld [vmem:[#allocation2 + $0x10] sm:$0xf]
    %v37 = vld [vmem:[#allocation2 + $0x14] sm:$0xf]
    %v38 = vld [vmem:[#allocation2 + $0x18] sm:$0xf]
    %v39 = vld [vmem:[#allocation2 + $0x1c] sm:$0xf]
    %v40 = vld [vmem:[#allocation2 + $0x20] sm:$0xf]
    %v41 = vld [vmem:[#allocation2 + $0x24] sm:$0xf]
    %v42 = vld [vmem:[#allocation2 + $0x28] sm:$0xf]
    %v43 = vld [vmem:[#allocation2 + $0x2c] sm:$0xf]
    %v44 = vld [vmem:[#allocation2 + $0x30] sm:$0xf]
    %v45 = vld [vmem:[#allocation2 + $0x34] sm:$0xf]
    %v46 = vld [vmem:[#allocation2 + $0x38] sm:$0xf]
    %v47 = vld [vmem:[#allocation2 + $0x3c] sm:$0xf]
    %v48 = vld [vmem:[%s2] sm:$0x1]
    %v50 = vperm.slane %v48, 0
    %v68 = vunpack.c.l.b16 %v32
    %v69 = vunpack.c.l.b16 %v33
    %v70 = vunpack.c.l.b16 %v34
    %v71 = vunpack.c.l.b16 %v35
    %v72 = vunpack.c.l.b16 %v36
    %v73 = vunpack.c.l.b16 %v37
    %v74 = vunpack.c.l.b16 %v38
    %v75 = vunpack.c.l.b16 %v39
    %v76 = vunpack.c.l.b16 %v40
    %v77 = vunpack.c.l.b16 %v41
    %v78 = vunpack.c.l.b16 %v42
    %v79 = vunpack.c.l.b16 %v43
    %v80 = vunpack.c.l.b16 %v44
    %v81 = vunpack.c.l.b16 %v45
    %v82 = vunpack.c.l.b16 %v46
    %v83 = vunpack.c.l.b16 %v47
    %v84 = vpack.c.b16 %v69, %v68
    %v85 = vpack.c.b16 %v71, %v70
    %v86 = vpack.c.b16 %v73, %v72
    %v87 = vpack.c.b16 %v75, %v74
    %v88 = vpack.c.b16 %v77, %v76
    %v89 = vpack.c.b16 %v79, %v78
    %v90 = vpack.c.b16 %v81, %v80
    %v91 = vpack.c.b16 %v83, %v82
    %100 = vmatpush.bf16.msra.mxu0 %v91
    %101 = vmatpush.bf16.msra.mxu0 %v90
    %102 = vmatpush.bf16.msra.mxu0 %v89
    %103 = vmatpush.bf16.msra.mxu0 %v88
    %104 = vmatpush.bf16.msra.mxu0 %v87
    %105 = vmatpush.bf16.msra.mxu0 %v86
    %106 = vmatpush.bf16.msra.mxu0 %v85
    %107 = vmatpush.bf16.msra.mxu0 %v84
    %108 = vmatmul.bf16.gmra.mxu0 %v31
    %v109 = vpop.f32.mrf.mxu0
    %v110 = vadd.f32 %v50, %v109
    %v111 = vpop.f32.mrf.mxu0
    %112 = vdwg.mxu0
    %113 = vst [vmem:[#allocation5] sm:$0xff] %v110
    // Predicated region
    $region18: #{net_forward.1} parent=1 // pred_check
      _
    $region19: #{net_forward.1} parent=1 // pred_check_branch
      %115 = sbr.rel (0) target = $region21
    $region20: #{net_forward.1} parent=1 // pred_region
      %117 = vsyncadd [#allocation4], 0
      %s119 = sshll.u32 [#allocation5], 4
      %s120 = int_to_ptr.vmem [resolvable:$true] %s119
      %s121 = sshll.u32 %s3, 4
      %s122 = int_to_ptr.hbm [resolvable:$true] %s121
      %124 = dma.vmem_to_hbm [thread:$0]  %s120, 128, %s122, [#allocation4]
    $region21: #{net_forward.1} parent=1 // pred_fallthru
      _
    // Predicated region
    $region22: #{net_forward.1} parent=1 // pred_check
      _
    $region23: #{net_forward.1} parent=1 // pred_check_branch
      %126 = sbr.rel (0) target = $region25
    $region24: #{net_forward.1} parent=1 // pred_region
      %128 = dma.done [#allocation4], 128
    $region25: #{net_forward.1} parent=1 // pred_fallthru
      _
    %129 = vsyncpa [#allocation3], 1
    %130 = vsyncpa [#allocation4], 1

</llo_original>
